<compile_context>
chip_gen: v5e
topology: v5e:2x2
jax: 0.10.0
libtpu: 0.0.40
codegen_flags: <defaults>
</compile_context>

<pallas_src>
import functools

import jax
import jax.numpy as jnp
from jax.experimental import pallas as pl
from jax.experimental.pallas import tpu as pltpu


# ----------------------------------------------------------------------------
# Kernel 1: Hopfield self-attention (causal mask) + full-attention softmax gate
# ----------------------------------------------------------------------------
def _hopfield_attention_kernel(x_ref, wqT_ref, wkT_ref, wvT_ref, woT_ref,
                               bq_ref, bk_ref, bv_ref, bo_ref, g_ref):
    # x_ref block: (1, S, D) for the current batch element (grid over B).
    x = x_ref[0]                                                         # (S, D)

    # Q/K/V projections (scale already folded into wqT/bq in the wrapper).
    q = jnp.dot(x, wqT_ref[...], preferred_element_type=jnp.float32) + bq_ref[...]
    k = jnp.dot(x, wkT_ref[...], preferred_element_type=jnp.float32) + bk_ref[...]
    v = jnp.dot(x, wvT_ref[...], preferred_element_type=jnp.float32) + bv_ref[...]

    # Association scores q @ k^T via dot_general (transposed RHS handled by MXU).
    scores = jax.lax.dot_general(q, k, (((1,), (1,)), ((), ())),
                                 preferred_element_type=jnp.float32)     # (S, S)

    # Causal association mask: triu(ones, diagonal=1) == mask out col > row.
    s = scores.shape[0]
    row = jax.lax.broadcasted_iota(jnp.int32, (s, s), 0)
    col = jax.lax.broadcasted_iota(jnp.int32, (s, s), 1)
    scores = jnp.where(col > row, jnp.float32(-1e30), scores)

    # Softmax over stored patterns (keys).
    m = jnp.max(scores, axis=-1, keepdims=True)
    p = jnp.exp(scores - m)
    p = p * pl.reciprocal(jnp.sum(p, axis=-1, keepdims=True), approx=False)

    # Retrieval + Hopfield output projection.
    h = jnp.dot(p, v, preferred_element_type=jnp.float32)                # (S, D)
    attn = jnp.dot(h, woT_ref[...],
                   preferred_element_type=jnp.float32) + bo_ref[...]     # (S, D)

    # full_attention=True: softmax over the flattened (S*D) values per batch.
    mg = jnp.max(attn, axis=-1, keepdims=True)                           # (S, 1)
    mg = jnp.max(mg, axis=0, keepdims=True)                              # (1, 1)
    eg = jnp.exp(attn - mg)
    sg = jnp.sum(jnp.sum(eg, axis=-1, keepdims=True), axis=0, keepdims=True)
    gate = eg * pl.reciprocal(sg, approx=False)                          # (S, D)

    # Gated features fed to the LSTM.
    g_ref[0] = (gate * x).astype(g_ref.dtype)


# ----------------------------------------------------------------------------
# Kernel 2: LSTM recurrence + fused target heads
# ----------------------------------------------------------------------------
def _lstm_head_kernel(x_ref, wih_ref, whh_ref, b_ref, whead_ref, bhead_ref,
                      out_ref, h_scr, c_scr, *, apply_activation):
    # x_ref:    (S, B, D) time-major gated features
    # wih_ref:  (4, D, H) per-gate input weights (transposed), gate order i,f,g,o
    # whh_ref:  (4, H, H) per-gate hidden weights (transposed)
    # b_ref:    (4, 1, H) combined b_ih + b_hh per gate
    # whead:    (H, T)    all target heads stacked (transposed)
    # bhead:    (1, T)
    # out_ref:  (S, B, T)
    h_scr[...] = jnp.zeros_like(h_scr)
    c_scr[...] = jnp.zeros_like(c_scr)

    # Hoist loop-invariant weight loads out of the recurrence.
    wih = [wih_ref[g] for g in range(4)]
    whh = [whh_ref[g] for g in range(4)]
    bias = [b_ref[g] for g in range(4)]
    w_head = whead_ref[...]
    b_head = bhead_ref[...]

    n_steps = x_ref.shape[0]

    @pl.loop(0, n_steps)
    def _(t):
        x_t = x_ref[t]                                                   # (B, D)
        h_prev = h_scr[...]
        c_prev = c_scr[...]

        def gate(g):
            return (jnp.dot(x_t, wih[g], preferred_element_type=jnp.float32)
                    + jnp.dot(h_prev, whh[g], preferred_element_type=jnp.float32)
                    + bias[g])

        i_g = jax.nn.sigmoid(gate(0))
        f_g = jax.nn.sigmoid(gate(1))
        g_g = jnp.tanh(gate(2))
        o_g = jax.nn.sigmoid(gate(3))

        c_new = f_g * c_prev + i_g * g_g
        h_new = o_g * jnp.tanh(c_new)
        c_scr[...] = c_new
        h_scr[...] = h_new

        # Fused target heads: one (B, H) @ (H, T) matmul per step.
        out = jnp.dot(h_new, w_head, preferred_element_type=jnp.float32) + b_head
        if apply_activation:
            out = jax.nn.sigmoid(out)
        out_ref[t] = out.astype(out_ref.dtype)


# ----------------------------------------------------------------------------
# Wrapper
# ----------------------------------------------------------------------------
def hopfield_lstm_forward(features, params, apply_activation=False):
    """Pallas implementation of HopfieldLSTM.forward (h_c=None path).

    features: (B, S, D) float32, batch_first.
    Returns a list (one per target head) of (B, S, output_size) arrays.
    """
    B, S, D = features.shape
    x = features.astype(jnp.float32)

    # ---- Hopfield attention weight prep (scale folded into Wq / bq) ----
    a = params["attn"]
    scale = 1.0 / float(D) ** 0.5
    wqT = (a["wq"].T * scale).astype(jnp.float32)                        # (D, D)
    bq = (a["bq"] * scale).reshape(1, D).astype(jnp.float32)
    wkT = a["wk"].T.astype(jnp.float32)
    bk = a["bk"].reshape(1, D).astype(jnp.float32)
    wvT = a["wv"].T.astype(jnp.float32)
    bv = a["bv"].reshape(1, D).astype(jnp.float32)
    woT = a["wo"].T.astype(jnp.float32)
    bo = a["bo"].reshape(1, D).astype(jnp.float32)

    row_spec = pl.BlockSpec((1, S, D), lambda b: (b, 0, 0))
    mat_spec = pl.BlockSpec((D, D), lambda b: (0, 0))      # weights stay resident
    bias_spec = pl.BlockSpec((1, D), lambda b: (0, 0))

    gated = pl.pallas_call(
        _hopfield_attention_kernel,
        out_shape=jax.ShapeDtypeStruct((B, S, D), jnp.float32),
        grid=(B,),
        in_specs=[row_spec, mat_spec, mat_spec, mat_spec, mat_spec,
                  bias_spec, bias_spec, bias_spec, bias_spec],
        out_specs=row_spec,
        compiler_params=pltpu.CompilerParams(dimension_semantics=("parallel",)),
    )(x, wqT, wkT, wvT, woT, bq, bk, bv, bo)

    # ---- LSTM + fused heads ----
    lstm = params["lstm"]
    H = lstm["w_hh"].shape[1]
    wih = jnp.transpose(lstm["w_ih"].reshape(4, H, D), (0, 2, 1)).astype(jnp.float32)
    whh = jnp.transpose(lstm["w_hh"].reshape(4, H, H), (0, 2, 1)).astype(jnp.float32)
    b_all = (lstm["b_ih"] + lstm["b_hh"]).reshape(4, 1, H).astype(jnp.float32)

    head_ws = [w for (w, _) in params["heads"]]
    head_bs = [bb for (_, bb) in params["heads"]]
    out_size = head_ws[0].shape[0]
    whead = jnp.concatenate([w.T for w in head_ws], axis=1).astype(jnp.float32)  # (H, T)
    bhead = jnp.concatenate(head_bs, axis=0).reshape(1, -1).astype(jnp.float32)  # (1, T)
    T = whead.shape[1]

    x_tm = jnp.transpose(gated, (1, 0, 2))                               # (S, B, D)

    vmem = pl.BlockSpec(memory_space=pltpu.MemorySpace.VMEM)
    out_tm = pl.pallas_call(
        functools.partial(_lstm_head_kernel, apply_activation=apply_activation),
        out_shape=jax.ShapeDtypeStruct((S, B, T), jnp.float32),
        in_specs=[vmem] * 6,
        out_specs=vmem,
        scratch_shapes=[pltpu.VMEM((B, H), jnp.float32),
                        pltpu.VMEM((B, H), jnp.float32)],
    )(x_tm, wih, whh, b_all, whead, bhead)

    out_bst = jnp.transpose(out_tm, (1, 0, 2))                           # (B, S, T)

    # ---- padded timesteps take the last valid timestep's output ----
    valid = jnp.any(features != 0, axis=-1)                              # (B, S)
    seq_len = jnp.maximum(jnp.sum(valid.astype(jnp.int32), axis=1), 1)   # (B,)
    idx = jnp.minimum(jnp.arange(S)[None, :], seq_len[:, None] - 1)      # (B, S)
    idx3 = jnp.broadcast_to(idx[:, :, None], out_bst.shape)
    out_bst = jnp.take_along_axis(out_bst, idx3, axis=1)

    return [out_bst[..., t * out_size:(t + 1) * out_size]
            for t in range(len(params["heads"]))]


# ----------------------------------------------------------------------------
# Pure-JAX reference (correctness check)
# ----------------------------------------------------------------------------
def _reference_forward(features, params, apply_activation=False):
    B, S, D = features.shape
    a = params["attn"]
    scale = 1.0 / float(D) ** 0.5
    q = features @ a["wq"].T + a["bq"]
    k = features @ a["wk"].T + a["bk"]
    v = features @ a["wv"].T + a["bv"]
    scores = jnp.einsum("bsd,btd->bst", q, k) * scale
    mask = jnp.triu(jnp.ones((S, S), dtype=bool), k=1)
    scores = jnp.where(mask[None, :, :], jnp.float32(-1e30), scores)
    attn = jax.nn.softmax(scores, axis=-1)
    h = jnp.einsum("bst,btd->bsd", attn, v)
    a_out = h @ a["wo"].T + a["bo"]
    gate = jax.nn.softmax(a_out.reshape(B, -1), axis=1).reshape(B, S, D)
    g = gate * features

    lstm = params["lstm"]
    H = lstm["w_hh"].shape[1]
    w_ih, w_hh = lstm["w_ih"], lstm["w_hh"]
    b = lstm["b_ih"] + lstm["b_hh"]

    def cell(carry, x_t):
        h_prev, c_prev = carry
        gates = x_t @ w_ih.T + h_prev @ w_hh.T + b
        i_g = jax.nn.sigmoid(gates[:, 0:H])
        f_g = jax.nn.sigmoid(gates[:, H:2 * H])
        g_g = jnp.tanh(gates[:, 2 * H:3 * H])
        o_g = jax.nn.sigmoid(gates[:, 3 * H:4 * H])
        c_new = f_g * c_prev + i_g * g_g
        h_new = o_g * jnp.tanh(c_new)
        return (h_new, c_new), h_new

    g_tm = jnp.transpose(g, (1, 0, 2))
    _, hs_tm = jax.lax.scan(cell, (jnp.zeros((B, H), jnp.float32),
                                   jnp.zeros((B, H), jnp.float32)), g_tm)
    hs = jnp.transpose(hs_tm, (1, 0, 2))

    valid = jnp.any(features != 0, axis=-1)
    seq_len = jnp.maximum(jnp.sum(valid.astype(jnp.int32), axis=1), 1)
    idx = jnp.minimum(jnp.arange(S)[None, :], seq_len[:, None] - 1)

    outs = []
    for (w, bb) in params["heads"]:
        o = hs @ w.T + bb
        o = jnp.take_along_axis(o, jnp.broadcast_to(idx[:, :, None], o.shape), axis=1)
        if apply_activation:
            o = jax.nn.sigmoid(o)
        outs.append(o)
    return outs


# ----------------------------------------------------------------------------
# Parameter init (deterministic; mimics the module's LSTM bias scheme)
# ----------------------------------------------------------------------------
def init_params(key, input_size, hidden_size, output_size=1, num_targets=1):
    D, H = input_size, hidden_size
    ks = jax.random.split(key, 10 + 2 * num_targets)

    def rnd(k, shape, s=0.1):
        return s * jax.random.normal(k, shape, jnp.float32)

    # init_weights(): biases zero, forget-gate slice [H:2H) set to 1 on both.
    b_ih = jnp.zeros((4 * H,), jnp.float32).at[H:2 * H].set(1.0)
    b_hh = jnp.zeros((4 * H,), jnp.float32).at[H:2 * H].set(1.0)

    params = {
        "attn": {
            "wq": rnd(ks[0], (D, D)), "bq": rnd(ks[1], (D,), 0.01),
            "wk": rnd(ks[2], (D, D)), "bk": rnd(ks[3], (D,), 0.01),
            "wv": rnd(ks[4], (D, D)), "bv": rnd(ks[5], (D,), 0.01),
            "wo": rnd(ks[6], (D, D)), "bo": rnd(ks[7], (D,), 0.01),
        },
        "lstm": {
            "w_ih": rnd(ks[8], (4 * H, D)),
            "w_hh": rnd(ks[9], (4 * H, H)),
            "b_ih": b_ih,
            "b_hh": b_hh,
        },
        "heads": [],
    }
    for t in range(num_targets):
        params["heads"].append((rnd(ks[10 + 2 * t], (output_size, H)),
                                rnd(ks[11 + 2 * t], (output_size,), 0.01)))
    return params


if __name__ == "__main__":
    # Small shapes consistent with the module: batch=2, seq=8, input_size=32,
    # hidden=32, num_targets=2, output_size=1.
    B, S, D, H = 2, 8, 32, 32
    num_targets, out_size = 2, 1

    key = jax.random.PRNGKey(0)
    k_params, k_feat = jax.random.split(key)
    params = init_params(k_params, input_size=D, hidden_size=H,
                         output_size=out_size, num_targets=num_targets)
    features = jax.random.normal(k_feat, (B, S, D), jnp.float32)
    # Simulate trailing padding on the second sequence (all-zero timesteps),
    # exercising the seq-length / last-valid-output propagation path.
    features = features.at[1, 6:, :].set(0.0)

    outs = hopfield_lstm_forward(features, params, apply_activation=False)
    outs = [jax.block_until_ready(o) for o in outs]

    refs = _reference_forward(features, params, apply_activation=False)
    for o, r in zip(outs, refs):
        assert o.shape == r.shape == (B, S, out_size)
        err = float(jnp.max(jnp.abs(o - r)))
        assert jnp.allclose(o, r, atol=1e-4, rtol=1e-4), err

    print("KERNEL_OK")
</pallas_src>

<mosaic_0001>
module attributes {stable_mosaic.version = 11 : i64} {
  func.func @_hopfield_attention_kernel(%arg0: i32, %arg1: memref<1x8x32xf32, #tpu.memory_space<vmem>>, %arg2: memref<32x32xf32, #tpu.memory_space<vmem>>, %arg3: memref<32x32xf32, #tpu.memory_space<vmem>>, %arg4: memref<32x32xf32, #tpu.memory_space<vmem>>, %arg5: memref<32x32xf32, #tpu.memory_space<vmem>>, %arg6: memref<1x32xf32, #tpu.memory_space<vmem>>, %arg7: memref<1x32xf32, #tpu.memory_space<vmem>>, %arg8: memref<1x32xf32, #tpu.memory_space<vmem>>, %arg9: memref<1x32xf32, #tpu.memory_space<vmem>>, %arg10: memref<1x8x32xf32, #tpu.memory_space<vmem>>) attributes {dimension_semantics = [#tpu.dimension_semantics<parallel>], iteration_bounds = array<i64: 2>, scalar_prefetch = 0 : i64, scratch_operands = 0 : i64, tpu.core_type = #tpu.core_type<tc>, window_params = [{transform_indices = @transform_0, window_bounds = array<i64: 1, 8, 32>}, {pipeline_mode = #tpu.pipeline_mode<synchronous>, transform_indices = @transform_1, window_bounds = array<i64: 32, 32>}, {pipeline_mode = #tpu.pipeline_mode<synchronous>, transform_indices = @transform_2, window_bounds = array<i64: 32, 32>}, {pipeline_mode = #tpu.pipeline_mode<synchronous>, transform_indices = @transform_3, window_bounds = array<i64: 32, 32>}, {pipeline_mode = #tpu.pipeline_mode<synchronous>, transform_indices = @transform_4, window_bounds = array<i64: 32, 32>}, {pipeline_mode = #tpu.pipeline_mode<synchronous>, transform_indices = @transform_5, window_bounds = array<i64: 1, 32>}, {pipeline_mode = #tpu.pipeline_mode<synchronous>, transform_indices = @transform_6, window_bounds = array<i64: 1, 32>}, {pipeline_mode = #tpu.pipeline_mode<synchronous>, transform_indices = @transform_7, window_bounds = array<i64: 1, 32>}, {pipeline_mode = #tpu.pipeline_mode<synchronous>, transform_indices = @transform_8, window_bounds = array<i64: 1, 32>}, {transform_indices = @transform_9, window_bounds = array<i64: 1, 8, 32>}]} {
    %c0 = arith.constant 0 : index
    %c0_0 = arith.constant 0 : index
    %c0_1 = arith.constant 0 : index
    %0 = vector.load %arg1[%c0, %c0_0, %c0_1] : memref<1x8x32xf32, #tpu.memory_space<vmem>>, vector<1x8x32xf32>
    %1 = vector.shape_cast %0 : vector<1x8x32xf32> to vector<8x32xf32>
    %c0_2 = arith.constant 0 : index
    %c0_3 = arith.constant 0 : index
    %2 = vector.load %arg2[%c0_2, %c0_3] : memref<32x32xf32, #tpu.memory_space<vmem>>, vector<32x32xf32>
    %cst = arith.constant dense<0.000000e+00> : vector<8x32xf32>
    %3 = tpu.matmul %1, %2, %cst {dimension_numbers = #tpu.dot_dimension_numbers<[1], [0], [0], [1], [0, 0, 1, 1], [], []>} : vector<8x32xf32>, vector<32x32xf32>, vector<8x32xf32> -> vector<8x32xf32>
    %c0_4 = arith.constant 0 : index
    %c0_5 = arith.constant 0 : index
    %4 = vector.load %arg6[%c0_4, %c0_5] : memref<1x32xf32, #tpu.memory_space<vmem>>, vector<1x32xf32>
    %5 = vector.broadcast %4 : vector<1x32xf32> to vector<8x32xf32>
    %6 = arith.addf %3, %5 : vector<8x32xf32>
    %c0_6 = arith.constant 0 : index
    %c0_7 = arith.constant 0 : index
    %7 = vector.load %arg3[%c0_6, %c0_7] : memref<32x32xf32, #tpu.memory_space<vmem>>, vector<32x32xf32>
    %cst_8 = arith.constant dense<0.000000e+00> : vector<8x32xf32>
    %8 = tpu.matmul %1, %7, %cst_8 {dimension_numbers = #tpu.dot_dimension_numbers<[1], [0], [0], [1], [0, 0, 1, 1], [], []>} : vector<8x32xf32>, vector<32x32xf32>, vector<8x32xf32> -> vector<8x32xf32>
    %c0_9 = arith.constant 0 : index
    %c0_10 = arith.constant 0 : index
    %9 = vector.load %arg7[%c0_9, %c0_10] : memref<1x32xf32, #tpu.memory_space<vmem>>, vector<1x32xf32>
    %10 = vector.broadcast %9 : vector<1x32xf32> to vector<8x32xf32>
    %11 = arith.addf %8, %10 : vector<8x32xf32>
    %c0_11 = arith.constant 0 : index
    %c0_12 = arith.constant 0 : index
    %12 = vector.load %arg4[%c0_11, %c0_12] : memref<32x32xf32, #tpu.memory_space<vmem>>, vector<32x32xf32>
    %cst_13 = arith.constant dense<0.000000e+00> : vector<8x32xf32>
    %13 = tpu.matmul %1, %12, %cst_13 {dimension_numbers = #tpu.dot_dimension_numbers<[1], [0], [0], [1], [0, 0, 1, 1], [], []>} : vector<8x32xf32>, vector<32x32xf32>, vector<8x32xf32> -> vector<8x32xf32>
    %c0_14 = arith.constant 0 : index
    %c0_15 = arith.constant 0 : index
    %14 = vector.load %arg8[%c0_14, %c0_15] : memref<1x32xf32, #tpu.memory_space<vmem>>, vector<1x32xf32>
    %15 = vector.broadcast %14 : vector<1x32xf32> to vector<8x32xf32>
    %16 = arith.addf %13, %15 : vector<8x32xf32>
    %cst_16 = arith.constant dense<0.000000e+00> : vector<8x8xf32>
    %17 = tpu.matmul %6, %11, %cst_16 {dimension_numbers = #tpu.dot_dimension_numbers<[1], [1], [0], [0], [0, 0, 1, 0], [], []>} : vector<8x32xf32>, vector<8x32xf32>, vector<8x8xf32> -> vector<8x8xf32>
    %18 = tpu.iota {dimensions = array<i32: 0>} : vector<8x8xi32>
    %19 = tpu.iota {dimensions = array<i32: 1>} : vector<8x8xi32>
    %20 = arith.cmpi sgt, %19, %18 : vector<8x8xi32>
    %cst_17 = arith.constant -1.000000e+30 : f32
    %21 = vector.broadcast %cst_17 : f32 to vector<8x8xf32>
    %22 = arith.select %20, %21, %17 : vector<8x8xi1>, vector<8x8xf32>
    %cst_18 = arith.constant dense<0xFF800000> : vector<8xf32>
    %23 = vector.multi_reduction <maximumf>, %22, %cst_18 [1] : vector<8x8xf32> to vector<8xf32>
    %24 = vector.shape_cast %23 : vector<8xf32> to vector<8x1xf32>
    %25 = vector.broadcast %24 : vector<8x1xf32> to vector<8x8xf32>
    %26 = arith.subf %22, %25 : vector<8x8xf32>
    %27 = math.exp %26 : vector<8x8xf32>
    %cst_19 = arith.constant dense<0.000000e+00> : vector<8xf32>
    %28 = vector.multi_reduction <add>, %27, %cst_19 [1] : vector<8x8xf32> to vector<8xf32>
    %29 = vector.shape_cast %28 : vector<8xf32> to vector<8x1xf32>
    %30 = tpu.reciprocal %29 : vector<8x1xf32> -> vector<8x1xf32>
    %31 = vector.broadcast %30 : vector<8x1xf32> to vector<8x8xf32>
    %32 = arith.mulf %27, %31 : vector<8x8xf32>
    %cst_20 = arith.constant dense<0.000000e+00> : vector<8x32xf32>
    %33 = tpu.matmul %32, %16, %cst_20 {dimension_numbers = #tpu.dot_dimension_numbers<[1], [0], [0], [1], [0, 0, 1, 1], [], []>} : vector<8x8xf32>, vector<8x32xf32>, vector<8x32xf32> -> vector<8x32xf32>
    %c0_21 = arith.constant 0 : index
    %c0_22 = arith.constant 0 : index
    %34 = vector.load %arg5[%c0_21, %c0_22] : memref<32x32xf32, #tpu.memory_space<vmem>>, vector<32x32xf32>
    %cst_23 = arith.constant dense<0.000000e+00> : vector<8x32xf32>
    %35 = tpu.matmul %33, %34, %cst_23 {dimension_numbers = #tpu.dot_dimension_numbers<[1], [0], [0], [1], [0, 0, 1, 1], [], []>} : vector<8x32xf32>, vector<32x32xf32>, vector<8x32xf32> -> vector<8x32xf32>
    %c0_24 = arith.constant 0 : index
    %c0_25 = arith.constant 0 : index
    %36 = vector.load %arg9[%c0_24, %c0_25] : memref<1x32xf32, #tpu.memory_space<vmem>>, vector<1x32xf32>
    %37 = vector.broadcast %36 : vector<1x32xf32> to vector<8x32xf32>
    %38 = arith.addf %35, %37 : vector<8x32xf32>
    %cst_26 = arith.constant dense<0xFF800000> : vector<8xf32>
    %39 = vector.multi_reduction <maximumf>, %38, %cst_26 [1] : vector<8x32xf32> to vector<8xf32>
    %40 = vector.shape_cast %39 : vector<8xf32> to vector<8x1xf32>
    %cst_27 = arith.constant dense<0xFF800000> : vector<1xf32>
    %41 = vector.multi_reduction <maximumf>, %40, %cst_27 [0] : vector<8x1xf32> to vector<1xf32>
    %42 = vector.shape_cast %41 : vector<1xf32> to vector<1x1xf32>
    %43 = vector.broadcast %42 : vector<1x1xf32> to vector<8x32xf32>
    %44 = arith.subf %38, %43 : vector<8x32xf32>
    %45 = math.exp %44 : vector<8x32xf32>
    %cst_28 = arith.constant dense<0.000000e+00> : vector<8xf32>
    %46 = vector.multi_reduction <add>, %45, %cst_28 [1] : vector<8x32xf32> to vector<8xf32>
    %47 = vector.shape_cast %46 : vector<8xf32> to vector<8x1xf32>
    %cst_29 = arith.constant dense<0.000000e+00> : vector<1xf32>
    %48 = vector.multi_reduction <add>, %47, %cst_29 [0] : vector<8x1xf32> to vector<1xf32>
    %49 = vector.shape_cast %48 : vector<1xf32> to vector<1x1xf32>
    %50 = tpu.reciprocal %49 : vector<1x1xf32> -> vector<1x1xf32>
    %51 = vector.broadcast %50 : vector<1x1xf32> to vector<8x32xf32>
    %52 = arith.mulf %45, %51 : vector<8x32xf32>
    %53 = arith.mulf %52, %1 : vector<8x32xf32>
    %c0_30 = arith.constant 0 : index
    %c0_31 = arith.constant 0 : index
    %c0_32 = arith.constant 0 : index
    %54 = vector.load %arg10[%c0_30, %c0_31, %c0_32] : memref<1x8x32xf32, #tpu.memory_space<vmem>>, vector<1x8x32xf32>
    %55 = vector.shape_cast %54 : vector<1x8x32xf32> to vector<8x32xf32>
    %56 = vector.shape_cast %53 : vector<8x32xf32> to vector<1x8x32xf32>
    tpu.vector_store %arg10[%c0_30, %c0_31, %c0_32], %56 {strides = array<i32>} : memref<1x8x32xf32, #tpu.memory_space<vmem>>, vector<1x8x32xf32>,
    return
  }
  func.func @transform_0(%arg0: i32) -> (i32, i32, i32) {
    %c0_i32 = arith.constant 0 : i32
    %c0_i32_0 = arith.constant 0 : i32
    %c0_i32_1 = arith.constant 0 : i32
    return %arg0, %c0_i32, %c0_i32_0 : i32, i32, i32
  }
  func.func @transform_1(%arg0: i32) -> (i32, i32) {
    %c0_i32 = arith.constant 0 : i32
    %c0_i32_0 = arith.constant 0 : i32
    %c0_i32_1 = arith.constant 0 : i32
    return %c0_i32, %c0_i32_0 : i32, i32
  }
  func.func @transform_2(%arg0: i32) -> (i32, i32) {
    %c0_i32 = arith.constant 0 : i32
    %c0_i32_0 = arith.constant 0 : i32
    %c0_i32_1 = arith.constant 0 : i32
    return %c0_i32, %c0_i32_0 : i32, i32
  }
  func.func @transform_3(%arg0: i32) -> (i32, i32) {
    %c0_i32 = arith.constant 0 : i32
    %c0_i32_0 = arith.constant 0 : i32
    %c0_i32_1 = arith.constant 0 : i32
    return %c0_i32, %c0_i32_0 : i32, i32
  }
  func.func @transform_4(%arg0: i32) -> (i32, i32) {
    %c0_i32 = arith.constant 0 : i32
    %c0_i32_0 = arith.constant 0 : i32
    %c0_i32_1 = arith.constant 0 : i32
    return %c0_i32, %c0_i32_0 : i32, i32
  }
  func.func @transform_5(%arg0: i32) -> (i32, i32) {
    %c0_i32 = arith.constant 0 : i32
    %c0_i32_0 = arith.constant 0 : i32
    %c0_i32_1 = arith.constant 0 : i32
    return %c0_i32, %c0_i32_0 : i32, i32
  }
  func.func @transform_6(%arg0: i32) -> (i32, i32) {
    %c0_i32 = arith.constant 0 : i32
    %c0_i32_0 = arith.constant 0 : i32
    %c0_i32_1 = arith.constant 0 : i32
    return %c0_i32, %c0_i32_0 : i32, i32
  }
  func.func @transform_7(%arg0: i32) -> (i32, i32) {
    %c0_i32 = arith.constant 0 : i32
    %c0_i32_0 = arith.constant 0 : i32
    %c0_i32_1 = arith.constant 0 : i32
    return %c0_i32, %c0_i32_0 : i32, i32
  }
  func.func @transform_8(%arg0: i32) -> (i32, i32) {
    %c0_i32 = arith.constant 0 : i32
    %c0_i32_0 = arith.constant 0 : i32
    %c0_i32_1 = arith.constant 0 : i32
    return %c0_i32, %c0_i32_0 : i32, i32
  }
  func.func @transform_9(%arg0: i32) -> (i32, i32, i32) {
    %c0_i32 = arith.constant 0 : i32
    %c0_i32_0 = arith.constant 0 : i32
    %c0_i32_1 = arith.constant 0 : i32
    return %arg0, %c0_i32, %c0_i32_0 : i32, i32, i32
  }
}

</mosaic_0001>

<llo_original>
// kernel: tpu_custom_call.1
$region0: #{tpu_custom_call.1}
  #allocation0 [shape = 'u32[]', space=smem, size = 0x4, offset = 0x4, fixed_abs, tag = 'smem constant byte address 0x4 - core index']
  #allocation1 [shape = 'u32[72,128]{1,0:T(1,128)}', space=vmem, size = 0x9000, scoped, tag = 'internal scratch']
  %s0 = inlined_call_operand.hbm [shape: f32[2,8,32], index: 0, kind: input, shape index: {}]
  %s1 = inlined_call_operand.hbm [shape: f32[32,32], index: 1, kind: input, shape index: {}]
  %s2 = inlined_call_operand.hbm [shape: f32[32,32], index: 2, kind: input, shape index: {}]
  %s3 = inlined_call_operand.hbm [shape: f32[32,32], index: 3, kind: input, shape index: {}]
  %s4 = inlined_call_operand.hbm [shape: f32[32,32], index: 4, kind: input, shape index: {}]
  %s5 = inlined_call_operand.vmem [shape: f32[1,32], index: 5, kind: input, shape index: {}]
  %s6 = inlined_call_operand.vmem [shape: f32[1,32], index: 6, kind: input, shape index: {}]
  %s7 = inlined_call_operand.vmem [shape: f32[1,32], index: 7, kind: input, shape index: {}]
  %s8 = inlined_call_operand.vmem [shape: f32[1,32], index: 8, kind: input, shape index: {}]
  %s9 = inlined_call_operand.hbm [shape: f32[2,8,32], index: 9, kind: output, shape index: {}]
  %s10 = sld [smem:[#allocation0]]
  $region89: #{tpu_custom_call.1} parent=0
    _
  %s12 = ssub.s32 1, %s10
  %s13 = scalar_select 0, %s12, %s10
  $region1: #{tpu_custom_call.1} parent=0
    #allocation2 [shape = 'u8[8192]{0}', space=vmem, size = 0x2000, scoped, tag = 'input window, operand 0']
    #allocation3 [shape = 's32[2]{0}', space=sflag, size = 0x8, scoped, tag = 'scoped memory for tpu_custom_call.1']
    #allocation4 [shape = 's32[2]{0}', space=sflag, size = 0x8, scoped, tag = 'scoped memory for tpu_custom_call.1']
    #allocation5 [shape = 'u8[16384]{0}', space=vmem, size = 0x4000, scoped, tag = 'input window, operand 1, single buffered']
    #allocation6 [shape = 's32[1]{0}', space=sflag, size = 0x4, scoped, tag = 'scoped memory for tpu_custom_call.1']
    #allocation7 [shape = 'u8[16384]{0}', space=vmem, size = 0x4000, scoped, tag = 'input window, operand 2, single buffered']
    #allocation8 [shape = 'u8[16384]{0}', space=vmem, size = 0x4000, scoped, tag = 'input window, operand 3, single buffered']
    #allocation9 [shape = 's32[1]{0}', space=sflag, size = 0x4, scoped, tag = 'scoped memory for tpu_custom_call.1']
    #allocation10 [shape = 'u8[16384]{0}', space=vmem, size = 0x4000, scoped, tag = 'input window, operand 4, single buffered']
    #allocation11 [shape = 'u8[8192]{0}', space=vmem, size = 0x2000, scoped, tag = 'output window, operand 0']
    %14 = vsyncpa [#allocation3], 0
    %s15 = scalar_lea.sflag [#allocation3], 1
    %16 = vsyncpa %s15, 0
    %17 = vsyncpa [#allocation6], 0
    %18 = vsyncpa [#allocation9], 0
    %19 = vsyncpa [#allocation4], 0
    %s20 = scalar_lea.sflag [#allocation4], 1
    %21 = vsyncpa %s20, 0
    loop: start=0, step=1, limit=4
    $region2: #{tpu_custom_call.1} parent=1 // loop_pre_header
      _
    $region3: #{tpu_custom_call.1} parent=1 // loop_header
      %s23 = sphi 0, %s27
      %p24 = scmp.ge.s32.totalorder %s23, 4
      %s33 = sphi 0, %s35
      %s36 = sphi 0, %s33
      %s37 = sphi 0, %s36
      %s53 = sphi 0, %s37
      %s57 = sphi 0, %s57
      %s59 = sphi 0, %s57
      %s60 = sphi 0, %s59
      %s74 = sphi 0, %s60
      %s78 = sphi 0, %s78
      %s80 = sphi 0, %s78
      %s81 = sphi 0, %s80
      %s95 = sphi 0, %s81
      %s99 = sphi 0, %s99
      %s101 = sphi 0, %s99
      %s102 = sphi 0, %s101
      %s116 = sphi 0, %s102
      %s120 = sphi 0, %s120
      %s122 = sphi 0, %s120
      %s123 = sphi 0, %s122
      %s137 = sphi 0, %s123
      %s141 = sphi 0, %s141
      %s143 = sphi 0, %s141
      %s144 = sphi 0, %s143
      %s158 = sphi 0, %s144
      %s162 = sphi 0, %s162
      %s164 = sphi 0, %s162
      %s165 = sphi 0, %s164
      %s179 = sphi 0, %s165
      %s183 = sphi 0, %s183
      %s185 = sphi 0, %s183
      %s186 = sphi 0, %s185
      %s200 = sphi 0, %s186
      %s204 = sphi 0, %s204
      %s206 = sphi 0, %s204
      %s207 = sphi 0, %s206
      %s221 = sphi 0, %s207
      %s227 = sphi 0, %s229
      %s230 = sphi 0, %s227
      %s231 = sphi 0, %s230
      %s247 = sphi 0, %s231
    $region4: #{tpu_custom_call.1} parent=1 // loop_header_branch
      %26 = sbr.rel (%p24) target = $region8
    $region5: #{tpu_custom_call.1} parent=1 // loop_body
      %s28 = ssub.s32 %s23, 1
      %s29 = ssub.s32 %s23, 2
      %s30 = sadd.s32 %s23, 1
      %s31 = ssub.s32 %s23, %s30
      %p32 = scmp.eq.s32.totalorder %s31, 0
      %s34 = sadd.s32 %s33, 1
      %s35 = scalar_select %p32, %s33, %s34
      %p38 = pneg %p32
      %p39 = scmp.eq.s32.totalorder %s23, 1
      %p40 = por %p38, %p39
      %p41 = scmp.ne.s32.totalorder %s33, %s36
      %p42 = scmp.eq.s32.totalorder %s23, 0
      %p43 = por %p41, %p42
      %p44 = scmp.ne.s32.totalorder %s33, %s36
      %p45 = scmp.eq.s32.totalorder %s28, 1
      %p46 = por %p44, %p45
      %p47 = scmp.ne.s32.totalorder %s36, %s37
      %p48 = scmp.eq.s32.totalorder %s28, 0
      %p49 = por %p47, %p48
      %p50 = scmp.ne.s32.totalorder %s36, %s37
      %p51 = scmp.eq.s32.totalorder %s29, 1
      %p52 = por %p50, %p51
      %p54 = scmp.ne.s32.totalorder %s37, %s53
      %p55 = scmp.eq.s32.totalorder %s29, 0
      %p56 = por %p54, %p55
      %s58 = sadd.s32 %s57, 1
      %p61 = scmp.eq.s32.totalorder %s23, 1
      %p62 = scmp.ne.s32.totalorder %s57, %s59
      %p63 = scmp.eq.s32.totalorder %s23, 0
      %p64 = por %p62, %p63
      %p65 = scmp.ne.s32.totalorder %s57, %s59
      %p66 = scmp.eq.s32.totalorder %s28, 1
      %p67 = por %p65, %p66
      %p68 = scmp.ne.s32.totalorder %s59, %s60
      %p69 = scmp.eq.s32.totalorder %s28, 0
      %p70 = por %p68, %p69
      %p71 = scmp.ne.s32.totalorder %s59, %s60
      %p72 = scmp.eq.s32.totalorder %s29, 1
      %p73 = por %p71, %p72
      %p75 = scmp.ne.s32.totalorder %s60, %s74
      %p76 = scmp.eq.s32.totalorder %s29, 0
      %p77 = por %p75, %p76
      %s79 = sadd.s32 %s78, 1
      %p82 = scmp.eq.s32.totalorder %s23, 1
      %p83 = scmp.ne.s32.totalorder %s78, %s80
      %p84 = scmp.eq.s32.totalorder %s23, 0
      %p85 = por %p83, %p84
      %p86 = scmp.ne.s32.totalorder %s78, %s80
      %p87 = scmp.eq.s32.totalorder %s28, 1
      %p88 = por %p86, %p87
      %p89 = scmp.ne.s32.totalorder %s80, %s81
      %p90 = scmp.eq.s32.totalorder %s28, 0
      %p91 = por %p89, %p90
      %p92 = scmp.ne.s32.totalorder %s80, %s81
      %p93 = scmp.eq.s32.totalorder %s29, 1
      %p94 = por %p92, %p93
      %p96 = scmp.ne.s32.totalorder %s81, %s95
      %p97 = scmp.eq.s32.totalorder %s29, 0
      %p98 = por %p96, %p97
      %s100 = sadd.s32 %s99, 1
      %p103 = scmp.eq.s32.totalorder %s23, 1
      %p104 = scmp.ne.s32.totalorder %s99, %s101
      %p105 = scmp.eq.s32.totalorder %s23, 0
      %p106 = por %p104, %p105
      %p107 = scmp.ne.s32.totalorder %s99, %s101
      %p108 = scmp.eq.s32.totalorder %s28, 1
      %p109 = por %p107, %p108
      %p110 = scmp.ne.s32.totalorder %s101, %s102
      %p111 = scmp.eq.s32.totalorder %s28, 0
      %p112 = por %p110, %p111
      %p113 = scmp.ne.s32.totalorder %s101, %s102
      %p114 = scmp.eq.s32.totalorder %s29, 1
      %p115 = por %p113, %p114
      %p117 = scmp.ne.s32.totalorder %s102, %s116
      %p118 = scmp.eq.s32.totalorder %s29, 0
      %p119 = por %p117, %p118
      %s121 = sadd.s32 %s120, 1
      %p124 = scmp.eq.s32.totalorder %s23, 1
      %p125 = scmp.ne.s32.totalorder %s120, %s122
      %p126 = scmp.eq.s32.totalorder %s23, 0
      %p127 = por %p125, %p126
      %p128 = scmp.ne.s32.totalorder %s120, %s122
      %p129 = scmp.eq.s32.totalorder %s28, 1
      %p130 = por %p128, %p129
      %p131 = scmp.ne.s32.totalorder %s122, %s123
      %p132 = scmp.eq.s32.totalorder %s28, 0
      %p133 = por %p131, %p132
      %p134 = scmp.ne.s32.totalorder %s122, %s123
      %p135 = scmp.eq.s32.totalorder %s29, 1
      %p136 = por %p134, %p135
      %p138 = scmp.ne.s32.totalorder %s123, %s137
      %p139 = scmp.eq.s32.totalorder %s29, 0
      %p140 = por %p138, %p139
      %s142 = sadd.s32 %s141, 1
      %p145 = scmp.eq.s32.totalorder %s23, 1
      %p146 = scmp.ne.s32.totalorder %s141, %s143
      %p147 = scmp.eq.s32.totalorder %s23, 0
      %p148 = por %p146, %p147
      %p149 = scmp.ne.s32.totalorder %s141, %s143
      %p150 = scmp.eq.s32.totalorder %s28, 1
      %p151 = por %p149, %p150
      %p152 = scmp.ne.s32.totalorder %s143, %s144
      %p153 = scmp.eq.s32.totalorder %s28, 0
      %p154 = por %p152, %p153
      %p155 = scmp.ne.s32.totalorder %s143, %s144
      %p156 = scmp.eq.s32.totalorder %s29, 1
      %p157 = por %p155, %p156
      %p159 = scmp.ne.s32.totalorder %s144, %s158
      %p160 = scmp.eq.s32.totalorder %s29, 0
      %p161 = por %p159, %p160
      %s163 = sadd.s32 %s162, 1
      %p166 = scmp.eq.s32.totalorder %s23, 1
      %p167 = scmp.ne.s32.totalorder %s162, %s164
      %p168 = scmp.eq.s32.totalorder %s23, 0
      %p169 = por %p167, %p168
      %p170 = scmp.ne.s32.totalorder %s162, %s164
      %p171 = scmp.eq.s32.totalorder %s28, 1
      %p172 = por %p170, %p171
      %p173 = scmp.ne.s32.totalorder %s164, %s165
      %p174 = scmp.eq.s32.totalorder %s28, 0
      %p175 = por %p173, %p174
      %p176 = scmp.ne.s32.totalorder %s164, %s165
      %p177 = scmp.eq.s32.totalorder %s29, 1
      %p178 = por %p176, %p177
      %p180 = scmp.ne.s32.totalorder %s165, %s179
      %p181 = scmp.eq.s32.totalorder %s29, 0
      %p182 = por %p180, %p181
      %s184 = sadd.s32 %s183, 1
      %p187 = scmp.eq.s32.totalorder %s23, 1
      %p188 = scmp.ne.s32.totalorder %s183, %s185
      %p189 = scmp.eq.s32.totalorder %s23, 0
      %p190 = por %p188, %p189
      %p191 = scmp.ne.s32.totalorder %s183, %s185
      %p192 = scmp.eq.s32.totalorder %s28, 1
      %p193 = por %p191, %p192
      %p194 = scmp.ne.s32.totalorder %s185, %s186
      %p195 = scmp.eq.s32.totalorder %s28, 0
      %p196 = por %p194, %p195
      %p197 = scmp.ne.s32.totalorder %s185, %s186
      %p198 = scmp.eq.s32.totalorder %s29, 1
      %p199 = por %p197, %p198
      %p201 = scmp.ne.s32.totalorder %s186, %s200
      %p202 = scmp.eq.s32.totalorder %s29, 0
      %p203 = por %p201, %p202
      %s205 = sadd.s32 %s204, 1
      %p208 = scmp.eq.s32.totalorder %s23, 1
      %p209 = scmp.ne.s32.totalorder %s204, %s206
      %p210 = scmp.eq.s32.totalorder %s23, 0
      %p211 = por %p209, %p210
      %p212 = scmp.ne.s32.totalorder %s204, %s206
      %p213 = scmp.eq.s32.totalorder %s28, 1
      %p214 = por %p212, %p213
      %p215 = scmp.ne.s32.totalorder %s206, %s207
      %p216 = scmp.eq.s32.totalorder %s28, 0
      %p217 = por %p215, %p216
      %p218 = scmp.ne.s32.totalorder %s206, %s207
      %p219 = scmp.eq.s32.totalorder %s29, 1
      %p220 = por %p218, %p219
      %p222 = scmp.ne.s32.totalorder %s207, %s221
      %p223 = scmp.eq.s32.totalorder %s29, 0
      %p224 = por %p222, %p223
      %s225 = ssub.s32 %s23, %s30
      %p226 = scmp.eq.s32.totalorder %s225, 0
      %s228 = sadd.s32 %s227, 1
      %s229 = scalar_select %p226, %s227, %s228
      %p232 = pneg %p226
      %p233 = scmp.eq.s32.totalorder %s23, 1
      %p234 = por %p232, %p233
      %p235 = scmp.ne.s32.totalorder %s227, %s230
      %p236 = scmp.eq.s32.totalorder %s23, 0
      %p237 = por %p235, %p236
      %p238 = scmp.ne.s32.totalorder %s227, %s230
      %p239 = scmp.eq.s32.totalorder %s28, 1
      %p240 = por %p238, %p239
      %p241 = scmp.ne.s32.totalorder %s230, %s231
      %p242 = scmp.eq.s32.totalorder %s28, 0
      %p243 = por %p241, %p242
      %p244 = scmp.ne.s32.totalorder %s230, %s231
      %p245 = scmp.eq.s32.totalorder %s29, 1
      %p246 = por %p244, %p245
      %p248 = scmp.ne.s32.totalorder %s231, %s247
      %p249 = scmp.eq.s32.totalorder %s29, 0
      %p250 = por %p248, %p249
      %p251 = scmp.le.s32.totalorder 1, %s23
      %p252 = scmp.lt.s32.totalorder %s23, 3
      %p253 = pnand %p251, %p252
      %p254 = pneg %p253
      // Predicated region
      $region9: #{tpu_custom_call.1} parent=5 // pred_check
        _
      $region10: #{tpu_custom_call.1} parent=5 // pred_check_branch
        %256 = sbr.rel (%p253) target = $region12
      $region11: #{tpu_custom_call.1} parent=5 // pred_region
        %s257 = ssub.s32 %s23, 1
        // Predicated region
        $region13: #{tpu_custom_call.1} parent=11 // pred_check
          %p258 = pneg %p70
        $region14: #{tpu_custom_call.1} parent=11 // pred_check_branch
          %260 = sbr.rel (%p258) target = $region16
        $region15: #{tpu_custom_call.1} parent=11 // pred_region
          %262 = vsyncadd [#allocation6], 0
          %s263 = sshll.u32 %s1, 4
          %s264 = int_to_ptr.hbm [resolvable:$true] %s263
          %s265 = sshll.u32 [#allocation5], 4
          %s266 = int_to_ptr.vmem [resolvable:$true] %s265
          %271 = dma.hbm_to_vmem [thread:$0]  %s264, 512, %s266, [#allocation6], 128, 128, 8
        $region16: #{tpu_custom_call.1} parent=11 // pred_fallthru
          _
        // Predicated region
        $region17: #{tpu_custom_call.1} parent=11 // pred_check
          %p272 = pneg %p91
        $region18: #{tpu_custom_call.1} parent=11 // pred_check_branch
          %274 = sbr.rel (%p272) target = $region20
        $region19: #{tpu_custom_call.1} parent=11 // pred_region
          %276 = vsyncadd [#allocation6], 0
          %s277 = sshll.u32 %s2, 4
          %s278 = int_to_ptr.hbm [resolvable:$true] %s277
          %s279 = sshll.u32 [#allocation7], 4
          %s280 = int_to_ptr.vmem [resolvable:$true] %s279
          %285 = dma.hbm_to_vmem [thread:$0]  %s278, 512, %s280, [#allocation6], 128, 128, 8
        $region20: #{tpu_custom_call.1} parent=11 // pred_fallthru
          _
        // Predicated region
        $region21: #{tpu_custom_call.1} parent=11 // pred_check
          %p286 = pneg %p112
        $region22: #{tpu_custom_call.1} parent=11 // pred_check_branch
          %288 = sbr.rel (%p286) target = $region24
        $region23: #{tpu_custom_call.1} parent=11 // pred_region
          %290 = vsyncadd [#allocation9], 0
          %s291 = sshll.u32 %s3, 4
          %s292 = int_to_ptr.hbm [resolvable:$true] %s291
          %s293 = sshll.u32 [#allocation8], 4
          %s294 = int_to_ptr.vmem [resolvable:$true] %s293
          %299 = dma.hbm_to_vmem [thread:$0]  %s292, 512, %s294, [#allocation9], 128, 128, 8
        $region24: #{tpu_custom_call.1} parent=11 // pred_fallthru
          _
        // Predicated region
        $region25: #{tpu_custom_call.1} parent=11 // pred_check
          %p300 = pneg %p133
        $region26: #{tpu_custom_call.1} parent=11 // pred_check_branch
          %302 = sbr.rel (%p300) target = $region28
        $region27: #{tpu_custom_call.1} parent=11 // pred_region
          %304 = vsyncadd [#allocation9], 0
          %s305 = sshll.u32 %s4, 4
          %s306 = int_to_ptr.hbm [resolvable:$true] %s305
          %s307 = sshll.u32 [#allocation10], 4
          %s308 = int_to_ptr.vmem [resolvable:$true] %s307
          %313 = dma.hbm_to_vmem [thread:$0]  %s306, 512, %s308, [#allocation9], 128, 128, 8
        $region28: #{tpu_custom_call.1} parent=11 // pred_fallthru
          _
        // Predicated region
        $region29: #{tpu_custom_call.1} parent=11 // pred_check
          %p314 = pneg %p154
        $region30: #{tpu_custom_call.1} parent=11 // pred_check_branch
          %316 = sbr.rel (%p314) target = $region32
        $region31: #{tpu_custom_call.1} parent=11 // pred_region
          _
        $region32: #{tpu_custom_call.1} parent=11 // pred_fallthru
          _
        // Predicated region
        $region33: #{tpu_custom_call.1} parent=11 // pred_check
          %p317 = pneg %p175
        $region34: #{tpu_custom_call.1} parent=11 // pred_check_branch
          %319 = sbr.rel (%p317) target = $region36
        $region35: #{tpu_custom_call.1} parent=11 // pred_region
          _
        $region36: #{tpu_custom_call.1} parent=11 // pred_fallthru
          _
        // Predicated region
        $region37: #{tpu_custom_call.1} parent=11 // pred_check
          %p320 = pneg %p196
        $region38: #{tpu_custom_call.1} parent=11 // pred_check_branch
          %322 = sbr.rel (%p320) target = $region40
        $region39: #{tpu_custom_call.1} parent=11 // pred_region
          _
        $region40: #{tpu_custom_call.1} parent=11 // pred_fallthru
          _
        // Predicated region
        $region41: #{tpu_custom_call.1} parent=11 // pred_check
          %p323 = pneg %p217
        $region42: #{tpu_custom_call.1} parent=11 // pred_check_branch
          %325 = sbr.rel (%p323) target = $region44
        $region43: #{tpu_custom_call.1} parent=11 // pred_region
          _
        $region44: #{tpu_custom_call.1} parent=11 // pred_fallthru
          _
      $region12: #{tpu_custom_call.1} parent=5 // pred_fallthru
        _
      %p326 = scmp.lt.s32.totalorder %s23, 2
      // Predicated region
      $region45: #{tpu_custom_call.1} parent=5 // pred_check
        %p327 = pneg %p326
      $region46: #{tpu_custom_call.1} parent=5 // pred_check_branch
        %329 = sbr.rel (%p327) target = $region48
      $region47: #{tpu_custom_call.1} parent=5 // pred_region
        // Predicated region
        $region49: #{tpu_custom_call.1} parent=47 // pred_check
          %p330 = pneg %p43
        $region50: #{tpu_custom_call.1} parent=47 // pred_check_branch
          %332 = sbr.rel (%p330) target = $region52
        $region51: #{tpu_custom_call.1} parent=47 // pred_region
          %s333 = sand.u32 %s33, 1
          %s334 = scalar_lea.sflag [#allocation3], %s333
          %s335 = sand.u32 %s33, 1
          %s336 = smul.addr %s335, 8
          %s337 = scalar_lea.vmem [#allocation2], %s336
          %339 = vsyncadd %s334, 0
          %s340 = smul.addr %s23, 8
          %s341 = scalar_lea.hbm %s0, %s340
          %s343 = sshll.u32 %s341, 4
          %s344 = int_to_ptr.hbm [resolvable:$true] %s343
          %s345 = sshll.u32 %s337, 4
          %s346 = int_to_ptr.vmem [resolvable:$true] %s345
          %348 = dma.hbm_to_vmem [thread:$0]  %s344, 128, %s346, %s334
        $region52: #{tpu_custom_call.1} parent=47 // pred_fallthru
          _
      $region48: #{tpu_custom_call.1} parent=5 // pred_fallthru
        _
      %p349 = scmp.le.s32.totalorder 1, %s23
      %p350 = scmp.lt.s32.totalorder %s23, 3
      %p351 = pnand %p349, %p350
      %p352 = pneg %p351
      // Predicated region
      $region53: #{tpu_custom_call.1} parent=5 // pred_check
        _
      $region54: #{tpu_custom_call.1} parent=5 // pred_check_branch
        %354 = sbr.rel (%p351) target = $region56
      $region55: #{tpu_custom_call.1} parent=5 // pred_region
        %s355 = ssub.s32 %s23, 1
        %s356 = sand.u32 %s36, 1
        %s357 = scalar_lea.sflag [#allocation3], %s356
        %s358 = sand.u32 %s36, 1
        %s359 = smul.addr %s358, 8
        %s360 = scalar_lea.vmem [#allocation2], %s359
        // Predicated region
        $region57: #{tpu_custom_call.1} parent=55 // pred_check
          %p361 = pneg %p49
        $region58: #{tpu_custom_call.1} parent=55 // pred_check_branch
          %363 = sbr.rel (%p361) target = $region60
        $region59: #{tpu_custom_call.1} parent=55 // pred_region
          %365 = dma.done %s357, 128
        $region60: #{tpu_custom_call.1} parent=55 // pred_fallthru
          _
        // Predicated region
        $region61: #{tpu_custom_call.1} parent=55 // pred_check
          %p366 = pneg %p70
        $region62: #{tpu_custom_call.1} parent=55 // pred_check_branch
          %368 = sbr.rel (%p366) target = $region64
        $region63: #{tpu_custom_call.1} parent=55 // pred_region
          %370 = dma.done [#allocation6], 512
        $region64: #{tpu_custom_call.1} parent=55 // pred_fallthru
          _
        // Predicated region
        $region65: #{tpu_custom_call.1} parent=55 // pred_check
          %p371 = pneg %p91
        $region66: #{tpu_custom_call.1} parent=55 // pred_check_branch
          %373 = sbr.rel (%p371) target = $region68
        $region67: #{tpu_custom_call.1} parent=55 // pred_region
          %375 = dma.done [#allocation6], 512
        $region68: #{tpu_custom_call.1} parent=55 // pred_fallthru
          _
        // Predicated region
        $region69: #{tpu_custom_call.1} parent=55 // pred_check
          %p376 = pneg %p112
        $region70: #{tpu_custom_call.1} parent=55 // pred_check_branch
          %378 = sbr.rel (%p376) target = $region72
        $region71: #{tpu_custom_call.1} parent=55 // pred_region
          %380 = dma.done [#allocation9], 512
        $region72: #{tpu_custom_call.1} parent=55 // pred_fallthru
          _
        // Predicated region
        $region73: #{tpu_custom_call.1} parent=55 // pred_check
          %p381 = pneg %p133
        $region74: #{tpu_custom_call.1} parent=55 // pred_check_branch
          %383 = sbr.rel (%p381) target = $region76
        $region75: #{tpu_custom_call.1} parent=55 // pred_region
          %385 = dma.done [#allocation9], 512
        $region76: #{tpu_custom_call.1} parent=55 // pred_fallthru
          _
        %s386 = sand.u32 %s36, 1
        %s387 = scalar_lea.sflag [#allocation3], %s386
        %s388 = sand.u32 %s36, 1
        %s389 = smul.addr %s388, 8
        %s390 = scalar_lea.vmem [#allocation2], %s389
        %p391 = pneg %p49
        %p392 = pneg %p46
        %p393 = pneg %p70
        %p394 = pneg %p67
        %p395 = pneg %p91
        %p396 = pneg %p88
        %p397 = pneg %p112
        %p398 = pneg %p109
        %p399 = pneg %p133
        %p400 = pneg %p130
        %p401 = pneg %p154
        %p402 = pneg %p151
        %p403 = pneg %p175
        %p404 = pneg %p172
        %p405 = pneg %p196
        %p406 = pneg %p193
        %p407 = pneg %p217
        %p408 = pneg %p214
        %p409 = pneg %p243
        %p410 = pneg %p240
        %s411 = sand.u32 %s230, 1
        %s412 = scalar_lea.sflag [#allocation4], %s411
        %s413 = sand.u32 %s230, 1
        %s414 = smul.addr %s413, 8
        %s415 = scalar_lea.vmem [#allocation11], %s414
        %v416 = vld [vmem:[%s360] sm:$0xff]
        %v417 = vld [vmem:[#allocation5] sm:$0xff]
        %v418 = vld [vmem:[#allocation5 + $0x8] sm:$0xff]
        %v419 = vld [vmem:[#allocation5 + $0x10] sm:$0xff]
        %v420 = vld [vmem:[#allocation5 + $0x18] sm:$0xff]
        %v421 = vld [vmem:[%s5] sm:$0x1]
        %v423 = vperm.slane %v421, 0
        %vm425 = vcmask 261120
        %v427 = vsel %vm425, %v416, 0
        %429 = vmatpush.msra.mxu0 0.0
        %430 = vmatpush.msra.mxu0 0.0
        %431 = vmatpush.msra.mxu0 0.0
        %432 = vmatpush.msra.mxu0 0.0
        %433 = vmatpush.msra.mxu0 0.0
        %434 = vmatpush.msra.mxu0 0.0
        %435 = vmatpush.msra.mxu0 0.0
        %436 = vmatpush.msra.mxu0 0.0
        %437 = vmatpush.msra.mxu0 0.0
        %438 = vmatpush.msra.mxu0 0.0
        %439 = vmatpush.msra.mxu0 0.0
        %440 = vmatpush.msra.mxu0 0.0
        %441 = vmatpush.msra.mxu0 %v420
        %442 = vmatpush.msra.mxu0 %v419
        %443 = vmatpush.msra.mxu0 %v418
        %444 = vmatpush.msra.mxu0 %v417
        %445 = vmatmul.f32.gmra.mxu0 %v427
        %v446 = vpop.f32.mrf.mxu0
        %v447 = vadd.f32 %v423, %v446
        %448 = vdwg.mxu0
        %v449 = vld [vmem:[#allocation7] sm:$0xff]
        %v450 = vld [vmem:[#allocation7 + $0x8] sm:$0xff]
        %v451 = vld [vmem:[#allocation7 + $0x10] sm:$0xff]
        %v452 = vld [vmem:[#allocation7 + $0x18] sm:$0xff]
        %v453 = vld [vmem:[%s6] sm:$0x1]
        %v455 = vperm.slane %v453, 0
        %457 = vmatpush.msra.mxu0 0.0
        %458 = vmatpush.msra.mxu0 0.0
        %459 = vmatpush.msra.mxu0 0.0
        %460 = vmatpush.msra.mxu0 0.0
        %461 = vmatpush.msra.mxu0 0.0
        %462 = vmatpush.msra.mxu0 0.0
        %463 = vmatpush.msra.mxu0 0.0
        %464 = vmatpush.msra.mxu0 0.0
        %465 = vmatpush.msra.mxu0 0.0
        %466 = vmatpush.msra.mxu0 0.0
        %467 = vmatpush.msra.mxu0 0.0
        %468 = vmatpush.msra.mxu0 0.0
        %469 = vmatpush.msra.mxu0 %v452
        %470 = vmatpush.msra.mxu0 %v451
        %471 = vmatpush.msra.mxu0 %v450
        %472 = vmatpush.msra.mxu0 %v449
        %473 = vmatmul.f32.gmra.mxu0 %v427
        %v474 = vpop.f32.mrf.mxu0
        %v475 = vadd.f32 %v455, %v474
        %476 = vdwg.mxu0
        %v477 = vld [vmem:[#allocation8] sm:$0xff]
        %v478 = vld [vmem:[#allocation8 + $0x8] sm:$0xff]
        %v479 = vld [vmem:[#allocation8 + $0x10] sm:$0xff]
        %v480 = vld [vmem:[#allocation8 + $0x18] sm:$0xff]
        %v481 = vld [vmem:[%s7] sm:$0x1]
        %v483 = vperm.slane %v481, 0
        %485 = vmatpush.msra.mxu0 0.0
        %486 = vmatpush.msra.mxu0 0.0
        %487 = vmatpush.msra.mxu0 0.0
        %488 = vmatpush.msra.mxu0 0.0
        %489 = vmatpush.msra.mxu0 0.0
        %490 = vmatpush.msra.mxu0 0.0
        %491 = vmatpush.msra.mxu0 0.0
        %492 = vmatpush.msra.mxu0 0.0
        %493 = vmatpush.msra.mxu0 0.0
        %494 = vmatpush.msra.mxu0 0.0
        %495 = vmatpush.msra.mxu0 0.0
        %496 = vmatpush.msra.mxu0 0.0
        %497 = vmatpush.msra.mxu0 %v480
        %498 = vmatpush.msra.mxu0 %v479
        %499 = vmatpush.msra.mxu0 %v478
        %500 = vmatpush.msra.mxu0 %v477
        %501 = vmatmul.f32.gmra.mxu0 %v427
        %v502 = vpop.f32.mrf.mxu0
        %v503 = vadd.f32 %v483, %v502
        %504 = vdwg.mxu0
        %v506 = vsel %vm425, %v447, 0
        %v509 = vsel %vm425, %v475, 0
        %511 = vmatpush.xpose.msra.mxu0 0.0
        %512 = vmatpush.xpose.msra.mxu0 0.0
        %513 = vmatpush.xpose.msra.mxu0 0.0
        %514 = vmatpush.xpose.msra.mxu0 0.0
        %515 = vmatpush.xpose.msra.mxu0 0.0
        %516 = vmatpush.xpose.msra.mxu0 0.0
        %517 = vmatpush.xpose.msra.mxu0 0.0
        %518 = vmatpush.xpose.msra.mxu0 0.0
        %519 = vmatpush.xpose.msra.mxu0 0.0
        %520 = vmatpush.xpose.msra.mxu0 0.0
        %521 = vmatpush.xpose.msra.mxu0 0.0
        %522 = vmatpush.xpose.msra.mxu0 0.0
        %523 = vmatpush.xpose.msra.mxu0 0.0
        %524 = vmatpush.xpose.msra.mxu0 0.0
        %525 = vmatpush.xpose.msra.mxu0 0.0
        %526 = vmatpush.xpose.msra.mxu0 %v509
        %527 = vmatmul.f32.gmra.mxu0 %v506
        %v528 = vpop.f32.mrf.mxu0
        %v529 = vadd.f32 0.0, %v528
        %530 = vdwg.mxu0
        %v531 = vlaneseq
        %v532 = vshrl.u32 %v531, 7
        %v533 = vlaneseq
        %v534 = vand.u32 %v533, 127
        %vm535 = vcmp.gt.s32.totalorder %v534, %v532
        %v536 = vsel %vm535, -1e+30, %v529
        %vm537 = vcmask 64512
        %v538 = vsel %vm537, %v536, -inf
        %539 = vmax.xlane.f32.xlu0 %v538
        %v540 = vpop.xlane.xlu0 %539
        %v541 = vsub.f32 %v536, %v540
        %v542 = vmul.f32 %v541, 1.442695
        %v543 = vpow.pop %v542
        %v544 = vsel %vm537, %v543, 0.0
        %545 = vadd.xlane.f32.xlu0 %v544
        %v546 = vpop.xlane.xlu0 %545
        %v547 = vrcp.pop %v546
        %v548 = vmul.f32 %v546, %v547
        %v549 = vsub.f32 1.0, %v548
        %v550 = vmul.f32 %v547, %v549
        %v551 = vadd.f32 %v547, %v550
        %vm552 = vweird.f32 %v546
        %vm553 = vweird.f32 %v547
        %vm554 = vmor %vm552, %vm553
        %v555 = vsel %vm554, %v547, %v551
        %v556 = vand.u32 2147483647, %v546
        %vm557 = vcmp.eq.f32.partialorder %v556, 8.507059e+37
        %v558 = vand.u32 %v546, 2147483648
        %v559 = vor.u32 1.1754944e-38, %v558
        %v560 = vsel %vm557, %v559, %v555
        %v561 = vmul.f32 %v543, %v560
        %v563 = vsel %vm537, %v561, 0
        %565 = vmatpush.msra.mxu0 0.0
        %566 = vmatpush.msra.mxu0 0.0
        %567 = vmatpush.msra.mxu0 0.0
        %568 = vmatpush.msra.mxu0 0.0
        %569 = vmatpush.msra.mxu0 0.0
        %570 = vmatpush.msra.mxu0 0.0
        %571 = vmatpush.msra.mxu0 0.0
        %572 = vmatpush.msra.mxu0 0.0
        %573 = vmatpush.msra.mxu0 0.0
        %574 = vmatpush.msra.mxu0 0.0
        %575 = vmatpush.msra.mxu0 0.0
        %576 = vmatpush.msra.mxu0 0.0
        %577 = vmatpush.msra.mxu0 0.0
        %578 = vmatpush.msra.mxu0 0.0
        %579 = vmatpush.msra.mxu0 0.0
        %580 = vmatpush.msra.mxu0 %v503
        %581 = vmatmul.f32.gmra.mxu0 %v563
        %v582 = vpop.f32.mrf.mxu0
        %v583 = vadd.f32 0.0, %v582
        %584 = vdwg.mxu0
        %v585 = vld [vmem:[#allocation10] sm:$0xff]
        %v586 = vld [vmem:[#allocation10 + $0x8] sm:$0xff]
        %v587 = vld [vmem:[#allocation10 + $0x10] sm:$0xff]
        %v588 = vld [vmem:[#allocation10 + $0x18] sm:$0xff]
        %v589 = vld [vmem:[%s8] sm:$0x1]
        %v591 = vperm.slane %v589, 0
        %v594 = vsel %vm425, %v583, 0
        %596 = vmatpush.msra.mxu0 0.0
        %597 = vmatpush.msra.mxu0 0.0
        %598 = vmatpush.msra.mxu0 0.0
        %599 = vmatpush.msra.mxu0 0.0
        %600 = vmatpush.msra.mxu0 0.0
        %601 = vmatpush.msra.mxu0 0.0
        %602 = vmatpush.msra.mxu0 0.0
        %603 = vmatpush.msra.mxu0 0.0
        %604 = vmatpush.msra.mxu0 0.0
        %605 = vmatpush.msra.mxu0 0.0
        %606 = vmatpush.msra.mxu0 0.0
        %607 = vmatpush.msra.mxu0 0.0
        %608 = vmatpush.msra.mxu0 %v588
        %609 = vmatpush.msra.mxu0 %v587
        %610 = vmatpush.msra.mxu0 %v586
        %611 = vmatpush.msra.mxu0 %v585
        %612 = vmatmul.f32.gmra.mxu0 %v594
        %v613 = vpop.f32.mrf.mxu0
        %v614 = vadd.f32 %v591, %v613
        %615 = vdwg.mxu0
        %v616 = vsel %vm425, %v614, -inf
        %617 = vmax.xlane.f32.xlu0 %v616
        %v618 = vpop.xlane.xlu0 %617
        %v619 = vrot.slane %v618, 4
        %v620 = vmax.f32 %v618, %v619
        %v621 = vrot.slane %v620, 2
        %v622 = vmax.f32 %v620, %v621
        %v623 = vrot.slane %v622, 1
        %v624 = vmax.f32 %v622, %v623
        %v625 = vsub.f32 %v614, %v624
        %v626 = vmul.f32 %v625, 1.442695
        %v627 = vpow.pop %v626
        %v628 = vsel %vm425, %v627, 0.0
        %629 = vadd.xlane.f32.xlu0 %v628
        %v630 = vpop.xlane.xlu0 %629
        %v631 = vrot.slane %v630, 4
        %v632 = vadd.f32 %v630, %v631
        %v633 = vrot.slane %v632, 2
        %v634 = vadd.f32 %v632, %v633
        %v635 = vrot.slane %v634, 1
        %v636 = vadd.f32 %v634, %v635
        %v637 = vrcp.pop %v636
        %v638 = vmul.f32 %v636, %v637
        %v639 = vsub.f32 1.0, %v638
        %v640 = vmul.f32 %v637, %v639
        %v641 = vadd.f32 %v637, %v640
        %vm642 = vweird.f32 %v636
        %vm643 = vweird.f32 %v637
        %vm644 = vmor %vm642, %vm643
        %v645 = vsel %vm644, %v637, %v641
        %v646 = vand.u32 2147483647, %v636
        %vm647 = vcmp.eq.f32.partialorder %v646, 8.507059e+37
        %v648 = vand.u32 %v636, 2147483648
        %v649 = vor.u32 1.1754944e-38, %v648
        %v650 = vsel %vm647, %v649, %v645
        %v651 = vmul.f32 %v627, %v650
        %v652 = vmul.f32 %v651, %v416
        %653 = vst.msk [vmem:[%s415] sm:$0xff] %vm425, %v652
        %s654 = sand.u32 %s230, 1
        %s655 = scalar_lea.sflag [#allocation4], %s654
        %s656 = sand.u32 %s230, 1
        %s657 = smul.addr %s656, 8
        %s658 = scalar_lea.vmem [#allocation11], %s657
        // Predicated region
        $region77: #{tpu_custom_call.1} parent=55 // pred_check
          %p659 = pneg %p240
        $region78: #{tpu_custom_call.1} parent=55 // pred_check_branch
          %661 = sbr.rel (%p659) target = $region80
        $region79: #{tpu_custom_call.1} parent=55 // pred_region
          %663 = vsyncadd %s655, 0
          %s664 = smul.addr %s28, 8
          %s665 = scalar_lea.hbm %s9, %s664
          %s667 = sshll.u32 %s658, 4
          %s668 = int_to_ptr.vmem [resolvable:$true] %s667
          %s669 = sshll.u32 %s665, 4
          %s670 = int_to_ptr.hbm [resolvable:$true] %s669
          %672 = dma.vmem_to_hbm [thread:$0]  %s668, 128, %s670, %s655
        $region80: #{tpu_custom_call.1} parent=55 // pred_fallthru
          _
      $region56: #{tpu_custom_call.1} parent=5 // pred_fallthru
        _
      %p673 = scmp.le.s32.totalorder 2, %s23
      // Predicated region
      $region81: #{tpu_custom_call.1} parent=5 // pred_check
        %p674 = pneg %p673
      $region82: #{tpu_custom_call.1} parent=5 // pred_check_branch
        %676 = sbr.rel (%p674) target = $region84
      $region83: #{tpu_custom_call.1} parent=5 // pred_region
        %s677 = ssub.s32 %s23, 2
        // Predicated region
        $region85: #{tpu_custom_call.1} parent=83 // pred_check
          %p678 = pneg %p246
        $region86: #{tpu_custom_call.1} parent=83 // pred_check_branch
          %680 = sbr.rel (%p678) target = $region88
        $region87: #{tpu_custom_call.1} parent=83 // pred_region
          %s681 = sand.u32 %s231, 1
          %s682 = scalar_lea.sflag [#allocation4], %s681
          %s683 = sand.u32 %s231, 1
          %s684 = smul.addr %s683, 8
          %s685 = scalar_lea.vmem [#allocation11], %s684
          %687 = dma.done %s682, 128
        $region88: #{tpu_custom_call.1} parent=83 // pred_fallthru
          _
      $region84: #{tpu_custom_call.1} parent=5 // pred_fallthru
        _
    $region6: #{tpu_custom_call.1} parent=1 // loop_footer
      %s27 = sadd.s32 1, %s23
    $region7: #{tpu_custom_call.1} parent=1 // loop_footer_branch
      %22 = sbr.rel target = $region3
    $region8: #{tpu_custom_call.1} parent=1 // loop_exit
      _
    %688 = vsyncpa [#allocation3], 1
    %s689 = scalar_lea.sflag [#allocation3], 1
    %690 = vsyncpa %s689, 1
    %691 = vsyncpa [#allocation6], 1
    %692 = vsyncpa [#allocation9], 1
    %693 = vsyncpa [#allocation4], 1
    %s694 = scalar_lea.sflag [#allocation4], 1
    %695 = vsyncpa %s694, 1

</llo_original>
